<compile_context>
chip_gen: v7x
topology: tpu7x:2x2x1
jax: 0.10.0
libtpu: 0.0.40
codegen_flags: <defaults>
</compile_context>

<pallas_src>
from functools import partial

import jax
import jax.numpy as jnp
import numpy as np
from jax.experimental import pallas as pl
from jax.experimental.pallas import tpu as pltpu


def afb_kernel(x_ref, w_ref, m_ref, o_ref):
    # x_ref: (TM, N)  bf16 rows of the flattened (B*N, N) input
    # w_ref: (TM, 1)  f32 per-row spectral weights (grid-invariant tile)
    # m_ref: (N, N)   bf16 precomputed U @ U.T (grid-invariant, VMEM-resident)
    # o_ref: (TM, N)  bf16 output rows
    #
    # Row-scale in f32 on the VPU (hidden under the MXU; avoids bf16 VALU
    # emulation on v5e), then feed the MXU in bf16 with f32 accumulation.
    xs = (x_ref[...].astype(jnp.float32) * w_ref[...]).astype(m_ref.dtype)
    o_ref[...] = jnp.dot(
        xs, m_ref[...], preferred_element_type=jnp.float32
    ).astype(o_ref.dtype)


def _pick_row_tile(batch: int, n: int, target_rows: int) -> int:
    """Largest tm = k*n with k | batch and tm <= target_rows.

    tm % n == 0 is required both for the grid-invariant weight-tile trick and
    so that R = batch*n divides evenly (no jnp.pad copy of an HBM-bound
    input).  We also prefer >= 2 grid steps whenever batch >= 2 so the
    "parallel" row-tile axis can shard across the two TensorCores on v7x.
    """
    best = n
    for k in range(1, batch + 1):
        if batch % k:
            continue
        if k * n > target_rows:
            break
        if batch // k >= 2 or batch == 1:
            best = k * n
    return best


@partial(jax.jit, static_argnames=("target_rows", "compute_dtype"))
def adaptive_fourier_forward(x, eigenvectors, spectral_weights, *,
                             target_rows=1024, compute_dtype=jnp.bfloat16):
    """y[b] = diag(w) @ x[b] @ (U @ U.T)  — exact torch-forward semantics.

    If `eigenvectors` is fixed across training/inference steps, the M fold
    below can be hoisted out and cached by the caller.
    """
    B, N, F = x.shape
    assert F == N, "torch reference requires n_features == n_nodes"
    R = B * N

    # Per-call constant: collapses the two (N,N) spectral matmuls into one.
    # HIGHEST precision only on this single dot (no global config mutation).
    M = jnp.dot(eigenvectors, eigenvectors.T,
                preferred_element_type=jnp.float32,
                precision=jax.lax.Precision.HIGHEST).astype(compute_dtype)

    # Fold batch into the MXU M dimension; bf16 halves the HBM traffic of the
    # dominant operand on this memory-bound kernel.
    x2 = x.reshape(R, N).astype(compute_dtype)

    tm = _pick_row_tile(B, N, target_rows)
    assert tm % N == 0 and R % tm == 0          # no padding path needed
    grid = R // tm

    # Grid-invariant (tm, 1) weight tile: global row r = i*tm + s has node
    # index (r % N) == (s % N) because tm % N == 0, so every tile sees the
    # same weight pattern.  Keeps the scale in-kernel on the VPU and avoids a
    # per-step lane-sparse (R,1) DMA.
    w_tile = jnp.tile(spectral_weights.astype(jnp.float32), tm // N).reshape(tm, 1)

    itm = x2.dtype.itemsize
    # Advisory cost hint so XLA can overlap neighboring ops with this kernel.
    cost = pl.CostEstimate(
        flops=2 * R * N * N,
        transcendentals=0,
        bytes_accessed=R * N * itm + N * N * itm + tm * 4 + R * N * itm,
    )

    # Explicit VMEM budget: double-buffered x/out tiles + w + resident M.
    # (v5e default scoped VMEM is 16 MiB; v7x physical VMEM is 64 MiB/TC.)
    per_step = (2 * tm * N * itm      # x tiles (double-buffered)
                + 2 * tm * 4          # w tile
                + 2 * N * N * itm     # M (grid-invariant; see note below)
                + 2 * tm * N * itm)   # out tiles (double-buffered)
    vmem_limit = int(min(128 * 1024 * 1024, max(32 * 1024 * 1024, 2 * per_step)))

    out = pl.pallas_call(
        afb_kernel,
        out_shape=jax.ShapeDtypeStruct((R, N), compute_dtype),
        grid=(grid,),
        in_specs=[
            pl.BlockSpec((tm, N), lambda i: (i, 0)),   # x row tile
            pl.BlockSpec((tm, 1), lambda i: (0, 0)),   # grid-invariant weights
            # M is grid-invariant; its second pipeline buffer is wasted VMEM.
            # For large N (>= 2048) single-buffer it (pipeline_mode=pl.Buffered(1))
            # or K-tile it over an extra "arbitrary" grid axis with an f32
            # accumulator (N >= 4096).  At demo sizes the waste is ~32 KiB.
            pl.BlockSpec((N, N), lambda i: (0, 0)),    # resident M = U @ U.T
        ],
        out_specs=pl.BlockSpec((tm, N), lambda i: (i, 0)),
        compiler_params=pltpu.CompilerParams(
            # Independent row tiles: shards across both TensorCores on v7x
            # (the tile picker keeps >= 2 grid steps whenever B >= 2).
            dimension_semantics=("parallel",),
            vmem_limit_bytes=vmem_limit,
        ),
        cost_estimate=cost,
    )(x2, w_tile, M)

    return out.reshape(B, N, N)


def adaptive_fourier_reference(x, U, w):
    """Pure-JAX transcription of the torch ops (f32, for verification)."""
    hp = jax.lax.Precision.HIGHEST
    x_spectral = jnp.matmul(U.T, jnp.transpose(x, (0, 2, 1)), precision=hp)
    x_spectral = jnp.transpose(x_spectral, (0, 2, 1))
    x_filtered = x_spectral * w[None, :, None]
    x_out = jnp.matmul(U, jnp.transpose(x_filtered, (0, 2, 1)), precision=hp)
    return jnp.transpose(x_out, (0, 2, 1))


if __name__ == "__main__":
    # Small but MXU/lane-friendly shapes: in_features must equal n_nodes, and
    # N = 128 keeps every tile lane-dense (no masked partial stores).
    B, N = 4, 128

    key = jax.random.PRNGKey(0)
    kx, ku, kw = jax.random.split(key, 3)

    x = jax.random.normal(kx, (B, N, N), dtype=jnp.float32)

    # Graph-Laplacian eigenvector surrogate (non-orthogonal on purpose so the
    # U @ U.T fold is actually exercised by the check).
    eigenvectors = jax.random.normal(ku, (N, N), dtype=jnp.float32) / np.sqrt(N)
    eigenvalues = jnp.linspace(0.0, 2.0, N, dtype=jnp.float32)   # unused in fwd

    # Module initializes spectral_weights = ones_like(eigenvalues); perturb as
    # if trained so the node-axis scaling is a non-trivial part of the check.
    spectral_weights = 1.0 + 0.1 * jax.random.normal(kw, (N,), dtype=jnp.float32)

    out = adaptive_fourier_forward(x, eigenvectors, spectral_weights)
    out = jax.block_until_ready(out)
    assert out.shape == (B, N, N)

    # Tolerance accounts for the bf16 HBM I/O (x, M, out) vs. the f32
    # reference; the algebraic U @ U.T fold itself is exact.
    ref = adaptive_fourier_reference(x, eigenvectors, spectral_weights)
    np.testing.assert_allclose(np.asarray(out.astype(jnp.float32)),
                               np.asarray(ref), rtol=5e-2, atol=5e-2)
    print("KERNEL_OK")
</pallas_src>

<mosaic_0001>
module attributes {stable_mosaic.version = 11 : i64} {
  func.func @afb_kernel(%arg0: i32, %arg1: memref<256x128xbf16, #tpu.memory_space<vmem>>, %arg2: memref<256x1xf32, #tpu.memory_space<vmem>>, %arg3: memref<128x128xbf16, #tpu.memory_space<vmem>>, %arg4: memref<256x128xbf16, #tpu.memory_space<vmem>>) attributes {dimension_semantics = [#tpu.dimension_semantics<parallel>], iteration_bounds = array<i64: 2>, scalar_prefetch = 0 : i64, scratch_operands = 0 : i64, tpu.core_type = #tpu.core_type<tc>, window_params = [{transform_indices = @transform_0, window_bounds = array<i64: 256, 128>}, {pipeline_mode = #tpu.pipeline_mode<synchronous>, transform_indices = @transform_1, window_bounds = array<i64: 256, 1>}, {pipeline_mode = #tpu.pipeline_mode<synchronous>, transform_indices = @transform_2, window_bounds = array<i64: 128, 128>}, {transform_indices = @transform_3, window_bounds = array<i64: 256, 128>}]} {
    %c0 = arith.constant 0 : index
    %c0_0 = arith.constant 0 : index
    %0 = vector.load %arg1[%c0, %c0_0] : memref<256x128xbf16, #tpu.memory_space<vmem>>, vector<256x128xbf16>
    %1 = arith.extf %0 : vector<256x128xbf16> to vector<256x128xf32>
    %c0_1 = arith.constant 0 : index
    %c0_2 = arith.constant 0 : index
    %2 = vector.load %arg2[%c0_1, %c0_2] : memref<256x1xf32, #tpu.memory_space<vmem>>, vector<256x1xf32>
    %3 = vector.broadcast %2 : vector<256x1xf32> to vector<256x128xf32>
    %4 = arith.mulf %1, %3 : vector<256x128xf32>
    %5 = arith.truncf %4 : vector<256x128xf32> to vector<256x128xbf16>
    %c0_3 = arith.constant 0 : index
    %c0_4 = arith.constant 0 : index
    %6 = vector.load %arg3[%c0_3, %c0_4] : memref<128x128xbf16, #tpu.memory_space<vmem>>, vector<128x128xbf16>
    %cst = arith.constant dense<0.000000e+00> : vector<256x128xf32>
    %7 = tpu.matmul %5, %6, %cst {dimension_numbers = #tpu.dot_dimension_numbers<[1], [0], [0], [1], [0, 0, 1, 1], [], []>} : vector<256x128xbf16>, vector<128x128xbf16>, vector<256x128xf32> -> vector<256x128xf32>
    %8 = arith.truncf %7 : vector<256x128xf32> to vector<256x128xbf16>
    %c0_5 = arith.constant 0 : index
    %c0_6 = arith.constant 0 : index
    %9 = vector.load %arg4[%c0_5, %c0_6] : memref<256x128xbf16, #tpu.memory_space<vmem>>, vector<256x128xbf16>
    tpu.vector_store %arg4[%c0_5, %c0_6], %8 {strides = array<i32>} : memref<256x128xbf16, #tpu.memory_space<vmem>>, vector<256x128xbf16>,
    return
  }
  func.func @transform_0(%arg0: i32) -> (i32, i32) {
    %c0_i32 = arith.constant 0 : i32
    %c0_i32_0 = arith.constant 0 : i32
    return %arg0, %c0_i32 : i32, i32
  }
  func.func @transform_1(%arg0: i32) -> (i32, i32) {
    %c0_i32 = arith.constant 0 : i32
    %c0_i32_0 = arith.constant 0 : i32
    %c0_i32_1 = arith.constant 0 : i32
    return %c0_i32, %c0_i32_0 : i32, i32
  }
  func.func @transform_2(%arg0: i32) -> (i32, i32) {
    %c0_i32 = arith.constant 0 : i32
    %c0_i32_0 = arith.constant 0 : i32
    %c0_i32_1 = arith.constant 0 : i32
    return %c0_i32, %c0_i32_0 : i32, i32
  }
  func.func @transform_3(%arg0: i32) -> (i32, i32) {
    %c0_i32 = arith.constant 0 : i32
    %c0_i32_0 = arith.constant 0 : i32
    return %arg0, %c0_i32 : i32, i32
  }
}

</mosaic_0001>

<llo_original>
// kernel: tile.8
$region0: #{tile.8}
  #allocation0 [shape = 's32[1]{0}', space=sflag, size = 0x4, scoped, tag = 'scoped memory for tile.8']
  %s0 = inlined_call_operand.vmem [shape: f32[128], index: 0, kind: input, shape index: {}]
  %s1 = inlined_call_operand.vmem [shape: f32[2,128], index: 1, kind: output, shape index: {}]
  // Predicated region
  $region2: #{tile.8} parent=0 // pred_check
    _
  $region3: #{tile.8} parent=0 // pred_check_branch
    %3 = sbr.rel (0) target = $region5
  $region4: #{tile.8} parent=0 // pred_region
    _
  $region5: #{tile.8} parent=0 // pred_fallthru
    _
  %v4 = vld [vmem:[%s0] ss:$0 sm:$0xff]
  %5 = vst [vmem:[%s1] sm:$0x3] %v4

// kernel: adaptive_fourier_forward.1
$region0: #{adaptive_fourier_forward.1}
  #allocation0 [shape = 'u32[]', space=smem, size = 0x4, offset = 0x4, fixed_abs, tag = 'smem constant byte address 0x4 - core index']
  #allocation1 [shape = 'u32[144,128]{1,0:T(1,128)}', space=vmem, size = 0x12000, scoped, tag = 'internal scratch']
  %s0 = inlined_call_operand.vmem [shape: bf16[512,128], index: 0, kind: input, shape index: {}]
  %s1 = inlined_call_operand.vmem [shape: f32[256,1], index: 1, kind: input, shape index: {}]
  %s2 = inlined_call_operand.vmem [shape: bf16[128,128], index: 2, kind: input, shape index: {}]
  %s3 = inlined_call_operand.hbm [shape: bf16[512,128], index: 3, kind: output, shape index: {}]
  %s4 = sld [smem:[#allocation0]]
  $region45: #{adaptive_fourier_forward.1} parent=0
    _
  %s6 = ssub.s32 1, %s4
  %s7 = scalar_select 0, %s6, %s4
  $region1: #{adaptive_fourier_forward.1} parent=0
    #allocation2 [shape = 'u8[131072]{0}', space=vmem, size = 0x20000, scoped, tag = 'output window, operand 0']
    #allocation3 [shape = 's32[2]{0}', space=sflag, size = 0x8, scoped, tag = 'scoped memory for adaptive_fourier_forward.1']
    %8 = vsyncpa [#allocation3], 0
    %s9 = scalar_lea.sflag [#allocation3], 1
    %10 = vsyncpa %s9, 0
    loop: start=0, step=1, limit=4
    $region2: #{adaptive_fourier_forward.1} parent=1 // loop_pre_header
      _
    $region3: #{adaptive_fourier_forward.1} parent=1 // loop_header
      %s12 = sphi 0, %s16
      %p13 = scmp.ge.s32.totalorder %s12, 4
      %s22 = sphi 0, %s24
      %s25 = sphi 0, %s22
      %s26 = sphi 0, %s25
      %s42 = sphi 0, %s26
      %s46 = sphi 0, %s46
      %s48 = sphi 0, %s46
      %s49 = sphi 0, %s48
      %s63 = sphi 0, %s49
      %s67 = sphi 0, %s67
      %s69 = sphi 0, %s67
      %s70 = sphi 0, %s69
      %s84 = sphi 0, %s70
      %s90 = sphi 0, %s92
      %s93 = sphi 0, %s90
      %s94 = sphi 0, %s93
      %s110 = sphi 0, %s94
    $region4: #{adaptive_fourier_forward.1} parent=1 // loop_header_branch
      %15 = sbr.rel (%p13) target = $region8
    $region5: #{adaptive_fourier_forward.1} parent=1 // loop_body
      %s17 = ssub.s32 %s12, 1
      %s18 = ssub.s32 %s12, 2
      %s19 = sadd.s32 %s12, 1
      %s20 = ssub.s32 %s12, %s19
      %p21 = scmp.eq.s32.totalorder %s20, 0
      %s23 = sadd.s32 %s22, 1
      %s24 = scalar_select %p21, %s22, %s23
      %p27 = pneg %p21
      %p28 = scmp.eq.s32.totalorder %s12, 1
      %p29 = por %p27, %p28
      %p30 = scmp.ne.s32.totalorder %s22, %s25
      %p31 = scmp.eq.s32.totalorder %s12, 0
      %p32 = por %p30, %p31
      %p33 = scmp.ne.s32.totalorder %s22, %s25
      %p34 = scmp.eq.s32.totalorder %s17, 1
      %p35 = por %p33, %p34
      %p36 = scmp.ne.s32.totalorder %s25, %s26
      %p37 = scmp.eq.s32.totalorder %s17, 0
      %p38 = por %p36, %p37
      %p39 = scmp.ne.s32.totalorder %s25, %s26
      %p40 = scmp.eq.s32.totalorder %s18, 1
      %p41 = por %p39, %p40
      %p43 = scmp.ne.s32.totalorder %s26, %s42
      %p44 = scmp.eq.s32.totalorder %s18, 0
      %p45 = por %p43, %p44
      %s47 = sadd.s32 %s46, 1
      %p50 = scmp.eq.s32.totalorder %s12, 1
      %p51 = scmp.ne.s32.totalorder %s46, %s48
      %p52 = scmp.eq.s32.totalorder %s12, 0
      %p53 = por %p51, %p52
      %p54 = scmp.ne.s32.totalorder %s46, %s48
      %p55 = scmp.eq.s32.totalorder %s17, 1
      %p56 = por %p54, %p55
      %p57 = scmp.ne.s32.totalorder %s48, %s49
      %p58 = scmp.eq.s32.totalorder %s17, 0
      %p59 = por %p57, %p58
      %p60 = scmp.ne.s32.totalorder %s48, %s49
      %p61 = scmp.eq.s32.totalorder %s18, 1
      %p62 = por %p60, %p61
      %p64 = scmp.ne.s32.totalorder %s49, %s63
      %p65 = scmp.eq.s32.totalorder %s18, 0
      %p66 = por %p64, %p65
      %s68 = sadd.s32 %s67, 1
      %p71 = scmp.eq.s32.totalorder %s12, 1
      %p72 = scmp.ne.s32.totalorder %s67, %s69
      %p73 = scmp.eq.s32.totalorder %s12, 0
      %p74 = por %p72, %p73
      %p75 = scmp.ne.s32.totalorder %s67, %s69
      %p76 = scmp.eq.s32.totalorder %s17, 1
      %p77 = por %p75, %p76
      %p78 = scmp.ne.s32.totalorder %s69, %s70
      %p79 = scmp.eq.s32.totalorder %s17, 0
      %p80 = por %p78, %p79
      %p81 = scmp.ne.s32.totalorder %s69, %s70
      %p82 = scmp.eq.s32.totalorder %s18, 1
      %p83 = por %p81, %p82
      %p85 = scmp.ne.s32.totalorder %s70, %s84
      %p86 = scmp.eq.s32.totalorder %s18, 0
      %p87 = por %p85, %p86
      %s88 = ssub.s32 %s12, %s19
      %p89 = scmp.eq.s32.totalorder %s88, 0
      %s91 = sadd.s32 %s90, 1
      %s92 = scalar_select %p89, %s90, %s91
      %p95 = pneg %p89
      %p96 = scmp.eq.s32.totalorder %s12, 1
      %p97 = por %p95, %p96
      %p98 = scmp.ne.s32.totalorder %s90, %s93
      %p99 = scmp.eq.s32.totalorder %s12, 0
      %p100 = por %p98, %p99
      %p101 = scmp.ne.s32.totalorder %s90, %s93
      %p102 = scmp.eq.s32.totalorder %s17, 1
      %p103 = por %p101, %p102
      %p104 = scmp.ne.s32.totalorder %s93, %s94
      %p105 = scmp.eq.s32.totalorder %s17, 0
      %p106 = por %p104, %p105
      %p107 = scmp.ne.s32.totalorder %s93, %s94
      %p108 = scmp.eq.s32.totalorder %s18, 1
      %p109 = por %p107, %p108
      %p111 = scmp.ne.s32.totalorder %s94, %s110
      %p112 = scmp.eq.s32.totalorder %s18, 0
      %p113 = por %p111, %p112
      %p114 = scmp.le.s32.totalorder 1, %s12
      %p115 = scmp.lt.s32.totalorder %s12, 3
      %p116 = pnand %p114, %p115
      %p117 = pneg %p116
      // Predicated region
      $region9: #{adaptive_fourier_forward.1} parent=5 // pred_check
        _
      $region10: #{adaptive_fourier_forward.1} parent=5 // pred_check_branch
        %119 = sbr.rel (%p116) target = $region12
      $region11: #{adaptive_fourier_forward.1} parent=5 // pred_region
        %s120 = ssub.s32 %s12, 1
        // Predicated region
        $region13: #{adaptive_fourier_forward.1} parent=11 // pred_check
          %p121 = pneg %p59
        $region14: #{adaptive_fourier_forward.1} parent=11 // pred_check_branch
          %123 = sbr.rel (%p121) target = $region16
        $region15: #{adaptive_fourier_forward.1} parent=11 // pred_region
          _
        $region16: #{adaptive_fourier_forward.1} parent=11 // pred_fallthru
          _
        // Predicated region
        $region17: #{adaptive_fourier_forward.1} parent=11 // pred_check
          %p124 = pneg %p80
        $region18: #{adaptive_fourier_forward.1} parent=11 // pred_check_branch
          %126 = sbr.rel (%p124) target = $region20
        $region19: #{adaptive_fourier_forward.1} parent=11 // pred_region
          _
        $region20: #{adaptive_fourier_forward.1} parent=11 // pred_fallthru
          _
      $region12: #{adaptive_fourier_forward.1} parent=5 // pred_fallthru
        _
      %p127 = scmp.lt.s32.totalorder %s12, 2
      // Predicated region
      $region21: #{adaptive_fourier_forward.1} parent=5 // pred_check
        %p128 = pneg %p127
      $region22: #{adaptive_fourier_forward.1} parent=5 // pred_check_branch
        %130 = sbr.rel (%p128) target = $region24
      $region23: #{adaptive_fourier_forward.1} parent=5 // pred_region
        // Predicated region
        $region25: #{adaptive_fourier_forward.1} parent=23 // pred_check
          %p131 = pneg %p32
        $region26: #{adaptive_fourier_forward.1} parent=23 // pred_check_branch
          %133 = sbr.rel (%p131) target = $region28
        $region27: #{adaptive_fourier_forward.1} parent=23 // pred_region
          %s134 = smul.u32 32, %s12
          %p135 = scmp.lt.s32.totalorder %s134, 63
          %s136 = scalar_select %p135, %s134, 63
          %s137 = smul.addr %s136, 4
          %s138 = scalar_lea.vmem %s0, %s137
          %s139 = smul.u32 32, %s12
        $region28: #{adaptive_fourier_forward.1} parent=23 // pred_fallthru
          _
      $region24: #{adaptive_fourier_forward.1} parent=5 // pred_fallthru
        _
      %p140 = scmp.le.s32.totalorder 1, %s12
      %p141 = scmp.lt.s32.totalorder %s12, 3
      %p142 = pnand %p140, %p141
      %p143 = pneg %p142
      // Predicated region
      $region29: #{adaptive_fourier_forward.1} parent=5 // pred_check
        _
      $region30: #{adaptive_fourier_forward.1} parent=5 // pred_check_branch
        %145 = sbr.rel (%p142) target = $region32
      $region31: #{adaptive_fourier_forward.1} parent=5 // pred_region
        %s146 = ssub.s32 %s12, 1
        %s147 = smul.u32 32, %s17
        %p148 = scmp.lt.s32.totalorder %s147, 63
        %s149 = scalar_select %p148, %s147, 63
        %s150 = smul.addr %s149, 4
        %s151 = scalar_lea.vmem %s0, %s150
        %p152 = pneg %p38
        %p153 = pneg %p35
        %p154 = pneg %p59
        %p155 = pneg %p56
        %p156 = pneg %p80
        %p157 = pneg %p77
        %p158 = pneg %p106
        %p159 = pneg %p103
        %s160 = sand.u32 %s93, 1
        %s161 = scalar_lea.sflag [#allocation3], %s160
        %s162 = sand.u32 %s93, 1
        %s163 = smul.addr %s162, 128
        %s164 = scalar_lea.vmem [#allocation2], %s163
        %s165 = smul.u32 32, %s17
        %p166 = scmp.lt.s32.totalorder %s165, 63
        %s167 = scalar_select %p166, %s165, 63
        %s168 = smul.addr %s167, 4
        %s169 = scalar_lea.vmem %s0, %s168
        %s170 = smul.u32 32, %s17
        %s171 = smul.u32 32, %s17
        %v173 = vld [vmem:[%s169] sm:$0xf]
        %v174 = vld [vmem:[%s169 + $0x4] sm:$0xf]
        %v175 = vld [vmem:[%s169 + $0x8] sm:$0xf]
        %v176 = vld [vmem:[%s169 + $0xc] sm:$0xf]
        %v177 = vld [vmem:[%s169 + $0x10] sm:$0xf]
        %v178 = vld [vmem:[%s169 + $0x14] sm:$0xf]
        %v179 = vld [vmem:[%s169 + $0x18] sm:$0xf]
        %v180 = vld [vmem:[%s169 + $0x1c] sm:$0xf]
        %v181 = vld [vmem:[%s169 + $0x20] sm:$0xf]
        %v182 = vld [vmem:[%s169 + $0x24] sm:$0xf]
        %v183 = vld [vmem:[%s169 + $0x28] sm:$0xf]
        %v184 = vld [vmem:[%s169 + $0x2c] sm:$0xf]
        %v185 = vld [vmem:[%s169 + $0x30] sm:$0xf]
        %v186 = vld [vmem:[%s169 + $0x34] sm:$0xf]
        %v187 = vld [vmem:[%s169 + $0x38] sm:$0xf]
        %v188 = vld [vmem:[%s169 + $0x3c] sm:$0xf]
        %v189 = vld [vmem:[%s169 + $0x40] sm:$0xf]
        %v190 = vld [vmem:[%s169 + $0x44] sm:$0xf]
        %v191 = vld [vmem:[%s169 + $0x48] sm:$0xf]
        %v192 = vld [vmem:[%s169 + $0x4c] sm:$0xf]
        %v193 = vld [vmem:[%s169 + $0x50] sm:$0xf]
        %v194 = vld [vmem:[%s169 + $0x54] sm:$0xf]
        %v195 = vld [vmem:[%s169 + $0x58] sm:$0xf]
        %v196 = vld [vmem:[%s169 + $0x5c] sm:$0xf]
        %v197 = vld [vmem:[%s169 + $0x60] sm:$0xf]
        %v198 = vld [vmem:[%s169 + $0x64] sm:$0xf]
        %v199 = vld [vmem:[%s169 + $0x68] sm:$0xf]
        %v200 = vld [vmem:[%s169 + $0x6c] sm:$0xf]
        %v201 = vld [vmem:[%s169 + $0x70] sm:$0xf]
        %v202 = vld [vmem:[%s169 + $0x74] sm:$0xf]
        %v203 = vld [vmem:[%s169 + $0x78] sm:$0xf]
        %v204 = vld [vmem:[%s169 + $0x7c] sm:$0xf]
        %v205 = vunpack.c.l.bf16 %v173
        %v206 = vunpack.c.l.bf16 %v174
        %v207 = vunpack.c.l.bf16 %v175
        %v208 = vunpack.c.l.bf16 %v176
        %v209 = vunpack.c.l.bf16 %v177
        %v210 = vunpack.c.l.bf16 %v178
        %v211 = vunpack.c.l.bf16 %v179
        %v212 = vunpack.c.l.bf16 %v180
        %v213 = vunpack.c.l.bf16 %v181
        %v214 = vunpack.c.l.bf16 %v182
        %v215 = vunpack.c.l.bf16 %v183
        %v216 = vunpack.c.l.bf16 %v184
        %v217 = vunpack.c.l.bf16 %v185
        %v218 = vunpack.c.l.bf16 %v186
        %v219 = vunpack.c.l.bf16 %v187
        %v220 = vunpack.c.l.bf16 %v188
        %v221 = vunpack.c.l.bf16 %v189
        %v222 = vunpack.c.l.bf16 %v190
        %v223 = vunpack.c.l.bf16 %v191
        %v224 = vunpack.c.l.bf16 %v192
        %v225 = vunpack.c.l.bf16 %v193
        %v226 = vunpack.c.l.bf16 %v194
        %v227 = vunpack.c.l.bf16 %v195
        %v228 = vunpack.c.l.bf16 %v196
        %v229 = vunpack.c.l.bf16 %v197
        %v230 = vunpack.c.l.bf16 %v198
        %v231 = vunpack.c.l.bf16 %v199
        %v232 = vunpack.c.l.bf16 %v200
        %v233 = vunpack.c.l.bf16 %v201
        %v234 = vunpack.c.l.bf16 %v202
        %v235 = vunpack.c.l.bf16 %v203
        %v236 = vunpack.c.l.bf16 %v204
        %v237 = vld [vmem:[%s1] sm:$0xff]
        %v238 = vld [vmem:[%s1 + $0x8] sm:$0xff]
        %v239 = vld [vmem:[%s1 + $0x10] sm:$0xff]
        %v240 = vld [vmem:[%s1 + $0x18] sm:$0xff]
        %v241 = vld [vmem:[%s1 + $0x20] sm:$0xff]
        %v242 = vld [vmem:[%s1 + $0x28] sm:$0xff]
        %v243 = vld [vmem:[%s1 + $0x30] sm:$0xff]
        %v244 = vld [vmem:[%s1 + $0x38] sm:$0xff]
        %v245 = vld [vmem:[%s1 + $0x40] sm:$0xff]
        %v246 = vld [vmem:[%s1 + $0x48] sm:$0xff]
        %v247 = vld [vmem:[%s1 + $0x50] sm:$0xff]
        %v248 = vld [vmem:[%s1 + $0x58] sm:$0xff]
        %v249 = vld [vmem:[%s1 + $0x60] sm:$0xff]
        %v250 = vld [vmem:[%s1 + $0x68] sm:$0xff]
        %v251 = vld [vmem:[%s1 + $0x70] sm:$0xff]
        %v252 = vld [vmem:[%s1 + $0x78] sm:$0xff]
        %v253 = vld [vmem:[%s1 + $0x80] sm:$0xff]
        %v254 = vld [vmem:[%s1 + $0x88] sm:$0xff]
        %v255 = vld [vmem:[%s1 + $0x90] sm:$0xff]
        %v256 = vld [vmem:[%s1 + $0x98] sm:$0xff]
        %v257 = vld [vmem:[%s1 + $0xa0] sm:$0xff]
        %v258 = vld [vmem:[%s1 + $0xa8] sm:$0xff]
        %v259 = vld [vmem:[%s1 + $0xb0] sm:$0xff]
        %v260 = vld [vmem:[%s1 + $0xb8] sm:$0xff]
        %v261 = vld [vmem:[%s1 + $0xc0] sm:$0xff]
        %v262 = vld [vmem:[%s1 + $0xc8] sm:$0xff]
        %v263 = vld [vmem:[%s1 + $0xd0] sm:$0xff]
        %v264 = vld [vmem:[%s1 + $0xd8] sm:$0xff]
        %v265 = vld [vmem:[%s1 + $0xe0] sm:$0xff]
        %v266 = vld [vmem:[%s1 + $0xe8] sm:$0xff]
        %v267 = vld [vmem:[%s1 + $0xf0] sm:$0xff]
        %v268 = vld [vmem:[%s1 + $0xf8] sm:$0xff]
        %270 = vset.pattern.permute.xlu0 0
        %271 = vperm.xlu0 %270, %v237
        %v272 = vpop.permute.xlu0 %271
        %275 = vset.pattern.permute.xlu0 0
        %276 = vperm.xlu0 %275, %v238
        %v277 = vpop.permute.xlu0 %276
        %280 = vset.pattern.permute.xlu0 0
        %281 = vperm.xlu0 %280, %v239
        %v282 = vpop.permute.xlu0 %281
        %285 = vset.pattern.permute.xlu0 0
        %286 = vperm.xlu0 %285, %v240
        %v287 = vpop.permute.xlu0 %286
        %290 = vset.pattern.permute.xlu0 0
        %291 = vperm.xlu0 %290, %v241
        %v292 = vpop.permute.xlu0 %291
        %295 = vset.pattern.permute.xlu0 0
        %296 = vperm.xlu0 %295, %v242
        %v297 = vpop.permute.xlu0 %296
        %300 = vset.pattern.permute.xlu0 0
        %301 = vperm.xlu0 %300, %v243
        %v302 = vpop.permute.xlu0 %301
        %305 = vset.pattern.permute.xlu0 0
        %306 = vperm.xlu0 %305, %v244
        %v307 = vpop.permute.xlu0 %306
        %310 = vset.pattern.permute.xlu0 0
        %311 = vperm.xlu0 %310, %v245
        %v312 = vpop.permute.xlu0 %311
        %315 = vset.pattern.permute.xlu0 0
        %316 = vperm.xlu0 %315, %v246
        %v317 = vpop.permute.xlu0 %316
        %320 = vset.pattern.permute.xlu0 0
        %321 = vperm.xlu0 %320, %v247
        %v322 = vpop.permute.xlu0 %321
        %325 = vset.pattern.permute.xlu0 0
        %326 = vperm.xlu0 %325, %v248
        %v327 = vpop.permute.xlu0 %326
        %330 = vset.pattern.permute.xlu0 0
        %331 = vperm.xlu0 %330, %v249
        %v332 = vpop.permute.xlu0 %331
        %335 = vset.pattern.permute.xlu0 0
        %336 = vperm.xlu0 %335, %v250
        %v337 = vpop.permute.xlu0 %336
        %340 = vset.pattern.permute.xlu0 0
        %341 = vperm.xlu0 %340, %v251
        %v342 = vpop.permute.xlu0 %341
        %345 = vset.pattern.permute.xlu0 0
        %346 = vperm.xlu0 %345, %v252
        %v347 = vpop.permute.xlu0 %346
        %350 = vset.pattern.permute.xlu0 0
        %351 = vperm.xlu0 %350, %v253
        %v352 = vpop.permute.xlu0 %351
        %355 = vset.pattern.permute.xlu0 0
        %356 = vperm.xlu0 %355, %v254
        %v357 = vpop.permute.xlu0 %356
        %360 = vset.pattern.permute.xlu0 0
        %361 = vperm.xlu0 %360, %v255
        %v362 = vpop.permute.xlu0 %361
        %365 = vset.pattern.permute.xlu0 0
        %366 = vperm.xlu0 %365, %v256
        %v367 = vpop.permute.xlu0 %366
        %370 = vset.pattern.permute.xlu0 0
        %371 = vperm.xlu0 %370, %v257
        %v372 = vpop.permute.xlu0 %371
        %375 = vset.pattern.permute.xlu0 0
        %376 = vperm.xlu0 %375, %v258
        %v377 = vpop.permute.xlu0 %376
        %380 = vset.pattern.permute.xlu0 0
        %381 = vperm.xlu0 %380, %v259
        %v382 = vpop.permute.xlu0 %381
        %385 = vset.pattern.permute.xlu0 0
        %386 = vperm.xlu0 %385, %v260
        %v387 = vpop.permute.xlu0 %386
        %390 = vset.pattern.permute.xlu0 0
        %391 = vperm.xlu0 %390, %v261
        %v392 = vpop.permute.xlu0 %391
        %395 = vset.pattern.permute.xlu0 0
        %396 = vperm.xlu0 %395, %v262
        %v397 = vpop.permute.xlu0 %396
        %400 = vset.pattern.permute.xlu0 0
        %401 = vperm.xlu0 %400, %v263
        %v402 = vpop.permute.xlu0 %401
        %405 = vset.pattern.permute.xlu0 0
        %406 = vperm.xlu0 %405, %v264
        %v407 = vpop.permute.xlu0 %406
        %410 = vset.pattern.permute.xlu0 0
        %411 = vperm.xlu0 %410, %v265
        %v412 = vpop.permute.xlu0 %411
        %415 = vset.pattern.permute.xlu0 0
        %416 = vperm.xlu0 %415, %v266
        %v417 = vpop.permute.xlu0 %416
        %420 = vset.pattern.permute.xlu0 0
        %421 = vperm.xlu0 %420, %v267
        %v422 = vpop.permute.xlu0 %421
        %425 = vset.pattern.permute.xlu0 0
        %426 = vperm.xlu0 %425, %v268
        %v427 = vpop.permute.xlu0 %426
        %v429 = vmul.f32 %v205, %v272
        %v430 = vmul.f32 %v206, %v277
        %v431 = vmul.f32 %v207, %v282
        %v432 = vmul.f32 %v208, %v287
        %v433 = vmul.f32 %v209, %v292
        %v434 = vmul.f32 %v210, %v297
        %v435 = vmul.f32 %v211, %v302
        %v436 = vmul.f32 %v212, %v307
        %v437 = vmul.f32 %v213, %v312
        %v438 = vmul.f32 %v214, %v317
        %v439 = vmul.f32 %v215, %v322
        %v440 = vmul.f32 %v216, %v327
        %v441 = vmul.f32 %v217, %v332
        %v442 = vmul.f32 %v218, %v337
        %v443 = vmul.f32 %v219, %v342
        %v444 = vmul.f32 %v220, %v347
        %v445 = vmul.f32 %v221, %v352
        %v446 = vmul.f32 %v222, %v357
        %v447 = vmul.f32 %v223, %v362
        %v448 = vmul.f32 %v224, %v367
        %v449 = vmul.f32 %v225, %v372
        %v450 = vmul.f32 %v226, %v377
        %v451 = vmul.f32 %v227, %v382
        %v452 = vmul.f32 %v228, %v387
        %v453 = vmul.f32 %v229, %v392
        %v454 = vmul.f32 %v230, %v397
        %v455 = vmul.f32 %v231, %v402
        %v456 = vmul.f32 %v232, %v407
        %v457 = vmul.f32 %v233, %v412
        %v458 = vmul.f32 %v234, %v417
        %v459 = vmul.f32 %v235, %v422
        %v460 = vmul.f32 %v236, %v427
        %v461 = vpack.c.bf16 %v430, %v429
        %v462 = vpack.c.bf16 %v432, %v431
        %v463 = vpack.c.bf16 %v434, %v433
        %v464 = vpack.c.bf16 %v436, %v435
        %v465 = vpack.c.bf16 %v438, %v437
        %v466 = vpack.c.bf16 %v440, %v439
        %v467 = vpack.c.bf16 %v442, %v441
        %v468 = vpack.c.bf16 %v444, %v443
        %v469 = vpack.c.bf16 %v446, %v445
        %v470 = vpack.c.bf16 %v448, %v447
        %v471 = vpack.c.bf16 %v450, %v449
        %v472 = vpack.c.bf16 %v452, %v451
        %v473 = vpack.c.bf16 %v454, %v453
        %v474 = vpack.c.bf16 %v456, %v455
        %v475 = vpack.c.bf16 %v458, %v457
        %v476 = vpack.c.bf16 %v460, %v459
        %v477 = vld [vmem:[%s2] sm:$0xf]
        %v478 = vld [vmem:[%s2 + $0x4] sm:$0xf]
        %v479 = vld [vmem:[%s2 + $0x8] sm:$0xf]
        %v480 = vld [vmem:[%s2 + $0xc] sm:$0xf]
        %v481 = vld [vmem:[%s2 + $0x10] sm:$0xf]
        %v482 = vld [vmem:[%s2 + $0x14] sm:$0xf]
        %v483 = vld [vmem:[%s2 + $0x18] sm:$0xf]
        %v484 = vld [vmem:[%s2 + $0x1c] sm:$0xf]
        %v485 = vld [vmem:[%s2 + $0x20] sm:$0xf]
        %v486 = vld [vmem:[%s2 + $0x24] sm:$0xf]
        %v487 = vld [vmem:[%s2 + $0x28] sm:$0xf]
        %v488 = vld [vmem:[%s2 + $0x2c] sm:$0xf]
        %v489 = vld [vmem:[%s2 + $0x30] sm:$0xf]
        %v490 = vld [vmem:[%s2 + $0x34] sm:$0xf]
        %v491 = vld [vmem:[%s2 + $0x38] sm:$0xf]
        %v492 = vld [vmem:[%s2 + $0x3c] sm:$0xf]
        %v509 = vunpack.c.l.b16 %v477
        %v510 = vunpack.c.l.b16 %v478
        %v511 = vunpack.c.l.b16 %v479
        %v512 = vunpack.c.l.b16 %v480
        %v513 = vunpack.c.l.b16 %v481
        %v514 = vunpack.c.l.b16 %v482
        %v515 = vunpack.c.l.b16 %v483
        %v516 = vunpack.c.l.b16 %v484
        %v517 = vunpack.c.l.b16 %v485
        %v518 = vunpack.c.l.b16 %v486
        %v519 = vunpack.c.l.b16 %v487
        %v520 = vunpack.c.l.b16 %v488
        %v521 = vunpack.c.l.b16 %v489
        %v522 = vunpack.c.l.b16 %v490
        %v523 = vunpack.c.l.b16 %v491
        %v524 = vunpack.c.l.b16 %v492
        %v525 = vpack.c.b16 %v510, %v509
        %v526 = vpack.c.b16 %v512, %v511
        %v527 = vpack.c.b16 %v514, %v513
        %v528 = vpack.c.b16 %v516, %v515
        %v529 = vpack.c.b16 %v518, %v517
        %v530 = vpack.c.b16 %v520, %v519
        %v531 = vpack.c.b16 %v522, %v521
        %v532 = vpack.c.b16 %v524, %v523
        %541 = vmatprep.subr.bf16.mxu0 0
        %542 = vmatpush1.bf16.msra.mxu0 %v525
        %543 = vmatprep.subr.bf16.mxu0 0
        %544 = vmatpush1.bf16.msra.mxu0 %v526
        %545 = vmatprep.subr.bf16.mxu0 0
        %546 = vmatpush1.bf16.msra.mxu0 %v527
        %547 = vmatprep.subr.bf16.mxu0 0
        %548 = vmatpush1.bf16.msra.mxu0 %v528
        %549 = vmatprep.subr.bf16.mxu0 0
        %550 = vmatpush1.bf16.msra.mxu0 %v529
        %551 = vmatprep.subr.bf16.mxu0 0
        %552 = vmatpush1.bf16.msra.mxu0 %v530
        %553 = vmatprep.subr.bf16.mxu0 0
        %554 = vmatpush1.bf16.msra.mxu0 %v531
        %555 = vmatprep.subr.bf16.mxu0 0
        %556 = vmatpush1.bf16.msra.mxu0 %v532
        %557 = vmatprep.subr.bf16.mxu0 0
        %558 = vmatpush1.bf16.msra.mxu0 0
        %559 = vmatprep.subr.bf16.mxu0 0
        %560 = vmatpush1.bf16.msra.mxu0 0
        %561 = vmatprep.subr.bf16.mxu0 0
        %562 = vmatpush1.bf16.msra.mxu0 0
        %563 = vmatprep.subr.bf16.mxu0 0
        %564 = vmatpush1.bf16.msra.mxu0 0
        %565 = vmatprep.subr.bf16.mxu0 0
        %566 = vmatpush1.bf16.msra.mxu0 0
        %567 = vmatprep.subr.bf16.mxu0 0
        %568 = vmatpush1.bf16.msra.mxu0 0
        %569 = vmatprep.subr.bf16.mxu0 0
        %570 = vmatpush1.bf16.msra.mxu0 0
        %571 = vmatprep.subr.bf16.mxu0 0
        %572 = vmatpush1.bf16.msra.mxu0 0
        %573 = vmatprep.mubr.bf16.mxu0 0
        %574 = vmatmul.mubr.bf16.gmra.mrb[0].mxu0 %v461
        %v575 = vpop.f32.mrb[0].mxu0
        %v576 = vadd.f32 0.0, %v575
        %v577 = vpop.f32.mrb[0].mxu0
        %v578 = vpop.f32.mrb[0].mxu0
        %v579 = vadd.f32 0.0, %v578
        %v580 = vpop.f32.mrb[0].mxu0
        %581 = vmatprep.mubr.bf16.mxu0 0
        %582 = vmatmul.mubr.bf16.gmra.mrb[0].mxu0 %v462
        %v583 = vpop.f32.mrb[0].mxu0
        %v584 = vadd.f32 0.0, %v583
        %v585 = vpop.f32.mrb[0].mxu0
        %v586 = vpop.f32.mrb[0].mxu0
        %v587 = vadd.f32 0.0, %v586
        %v588 = vpop.f32.mrb[0].mxu0
        %589 = vmatprep.mubr.bf16.mxu0 0
        %590 = vmatmul.mubr.bf16.gmra.mrb[0].mxu0 %v463
        %v591 = vpop.f32.mrb[0].mxu0
        %v592 = vadd.f32 0.0, %v591
        %v593 = vpop.f32.mrb[0].mxu0
        %v594 = vpop.f32.mrb[0].mxu0
        %v595 = vadd.f32 0.0, %v594
        %v596 = vpop.f32.mrb[0].mxu0
        %597 = vmatprep.mubr.bf16.mxu0 0
        %598 = vmatmul.mubr.bf16.gmra.mrb[0].mxu0 %v464
        %v599 = vpop.f32.mrb[0].mxu0
        %v600 = vadd.f32 0.0, %v599
        %v601 = vpop.f32.mrb[0].mxu0
        %v602 = vpop.f32.mrb[0].mxu0
        %v603 = vadd.f32 0.0, %v602
        %v604 = vpop.f32.mrb[0].mxu0
        %605 = vmatprep.mubr.bf16.mxu0 0
        %606 = vmatmul.mubr.bf16.gmra.mrb[0].mxu0 %v465
        %v607 = vpop.f32.mrb[0].mxu0
        %v608 = vadd.f32 0.0, %v607
        %v609 = vpop.f32.mrb[0].mxu0
        %v610 = vpop.f32.mrb[0].mxu0
        %v611 = vadd.f32 0.0, %v610
        %v612 = vpop.f32.mrb[0].mxu0
        %613 = vmatprep.mubr.bf16.mxu0 0
        %614 = vmatmul.mubr.bf16.gmra.mrb[0].mxu0 %v466
        %v615 = vpop.f32.mrb[0].mxu0
        %v616 = vadd.f32 0.0, %v615
        %v617 = vpop.f32.mrb[0].mxu0
        %v618 = vpop.f32.mrb[0].mxu0
        %v619 = vadd.f32 0.0, %v618
        %v620 = vpop.f32.mrb[0].mxu0
        %621 = vmatprep.mubr.bf16.mxu0 0
        %622 = vmatmul.mubr.bf16.gmra.mrb[0].mxu0 %v467
        %v623 = vpop.f32.mrb[0].mxu0
        %v624 = vadd.f32 0.0, %v623
        %v625 = vpop.f32.mrb[0].mxu0
        %v626 = vpop.f32.mrb[0].mxu0
        %v627 = vadd.f32 0.0, %v626
        %v628 = vpop.f32.mrb[0].mxu0
        %629 = vmatprep.mubr.bf16.mxu0 0
        %630 = vmatmul.mubr.bf16.gmra.mrb[0].mxu0 %v468
        %v631 = vpop.f32.mrb[0].mxu0
        %v632 = vadd.f32 0.0, %v631
        %v633 = vpop.f32.mrb[0].mxu0
        %v634 = vpop.f32.mrb[0].mxu0
        %v635 = vadd.f32 0.0, %v634
        %v636 = vpop.f32.mrb[0].mxu0
        %637 = vmatprep.mubr.bf16.mxu0 0
        %638 = vmatmul.mubr.bf16.gmra.mrb[0].mxu0 %v469
        %v639 = vpop.f32.mrb[0].mxu0
        %v640 = vadd.f32 0.0, %v639
        %v641 = vpop.f32.mrb[0].mxu0
        %v642 = vpop.f32.mrb[0].mxu0
        %v643 = vadd.f32 0.0, %v642
        %v644 = vpop.f32.mrb[0].mxu0
        %645 = vmatprep.mubr.bf16.mxu0 0
        %646 = vmatmul.mubr.bf16.gmra.mrb[0].mxu0 %v470
        %v647 = vpop.f32.mrb[0].mxu0
        %v648 = vadd.f32 0.0, %v647
        %v649 = vpop.f32.mrb[0].mxu0
        %v650 = vpop.f32.mrb[0].mxu0
        %v651 = vadd.f32 0.0, %v650
        %v652 = vpop.f32.mrb[0].mxu0
        %653 = vmatprep.mubr.bf16.mxu0 0
        %654 = vmatmul.mubr.bf16.gmra.mrb[0].mxu0 %v471
        %v655 = vpop.f32.mrb[0].mxu0
        %v656 = vadd.f32 0.0, %v655
        %v657 = vpop.f32.mrb[0].mxu0
        %v658 = vpop.f32.mrb[0].mxu0
        %v659 = vadd.f32 0.0, %v658
        %v660 = vpop.f32.mrb[0].mxu0
        %661 = vmatprep.mubr.bf16.mxu0 0
        %662 = vmatmul.mubr.bf16.gmra.mrb[0].mxu0 %v472
        %v663 = vpop.f32.mrb[0].mxu0
        %v664 = vadd.f32 0.0, %v663
        %v665 = vpop.f32.mrb[0].mxu0
        %v666 = vpop.f32.mrb[0].mxu0
        %v667 = vadd.f32 0.0, %v666
        %v668 = vpop.f32.mrb[0].mxu0
        %669 = vmatprep.mubr.bf16.mxu0 0
        %670 = vmatmul.mubr.bf16.gmra.mrb[0].mxu0 %v473
        %v671 = vpop.f32.mrb[0].mxu0
        %v672 = vadd.f32 0.0, %v671
        %v673 = vpop.f32.mrb[0].mxu0
        %v674 = vpop.f32.mrb[0].mxu0
        %v675 = vadd.f32 0.0, %v674
        %v676 = vpop.f32.mrb[0].mxu0
        %677 = vmatprep.mubr.bf16.mxu0 0
        %678 = vmatmul.mubr.bf16.gmra.mrb[0].mxu0 %v474
        %v679 = vpop.f32.mrb[0].mxu0
        %v680 = vadd.f32 0.0, %v679
        %v681 = vpop.f32.mrb[0].mxu0
        %v682 = vpop.f32.mrb[0].mxu0
        %v683 = vadd.f32 0.0, %v682
        %v684 = vpop.f32.mrb[0].mxu0
        %685 = vmatprep.mubr.bf16.mxu0 0
        %686 = vmatmul.mubr.bf16.gmra.mrb[0].mxu0 %v475
        %v687 = vpop.f32.mrb[0].mxu0
        %v688 = vadd.f32 0.0, %v687
        %v689 = vpop.f32.mrb[0].mxu0
        %v690 = vpop.f32.mrb[0].mxu0
        %v691 = vadd.f32 0.0, %v690
        %v692 = vpop.f32.mrb[0].mxu0
        %693 = vmatprep.mubr.bf16.mxu0 0
        %694 = vmatmul.mubr.bf16.gmra.mrb[0].mxu0 %v476
        %v695 = vpop.f32.mrb[0].mxu0
        %v696 = vadd.f32 0.0, %v695
        %v697 = vpop.f32.mrb[0].mxu0
        %v698 = vpop.f32.mrb[0].mxu0
        %v699 = vadd.f32 0.0, %v698
        %v700 = vpop.f32.mrb[0].mxu0
        %701 = vdwg.mxu0
        %v702 = vpack.c.bf16 %v579, %v576
        %v703 = vpack.c.bf16 %v587, %v584
        %v704 = vpack.c.bf16 %v595, %v592
        %v705 = vpack.c.bf16 %v603, %v600
        %v706 = vpack.c.bf16 %v611, %v608
        %v707 = vpack.c.bf16 %v619, %v616
        %v708 = vpack.c.bf16 %v627, %v624
        %v709 = vpack.c.bf16 %v635, %v632
        %v710 = vpack.c.bf16 %v643, %v640
        %v711 = vpack.c.bf16 %v651, %v648
        %v712 = vpack.c.bf16 %v659, %v656
        %v713 = vpack.c.bf16 %v667, %v664
        %v714 = vpack.c.bf16 %v675, %v672
        %v715 = vpack.c.bf16 %v683, %v680
        %v716 = vpack.c.bf16 %v691, %v688
        %v717 = vpack.c.bf16 %v699, %v696
        %v734 = vunpack.c.l.b16 %v702
        %v735 = vunpack.c.h.b16 %v702
        %v736 = vunpack.c.l.b16 %v703
        %v737 = vunpack.c.h.b16 %v703
        %v738 = vunpack.c.l.b16 %v704
        %v739 = vunpack.c.h.b16 %v704
        %v740 = vunpack.c.l.b16 %v705
        %v741 = vunpack.c.h.b16 %v705
        %v742 = vunpack.c.l.b16 %v706
        %v743 = vunpack.c.h.b16 %v706
        %v744 = vunpack.c.l.b16 %v707
        %v745 = vunpack.c.h.b16 %v707
        %v746 = vunpack.c.l.b16 %v708
        %v747 = vunpack.c.h.b16 %v708
        %v748 = vunpack.c.l.b16 %v709
        %v749 = vunpack.c.h.b16 %v709
        %v750 = vunpack.c.l.b16 %v710
        %v751 = vunpack.c.h.b16 %v710
        %v752 = vunpack.c.l.b16 %v711
        %v753 = vunpack.c.h.b16 %v711
        %v754 = vunpack.c.l.b16 %v712
        %v755 = vunpack.c.h.b16 %v712
        %v756 = vunpack.c.l.b16 %v713
        %v757 = vunpack.c.h.b16 %v713
        %v758 = vunpack.c.l.b16 %v714
        %v759 = vunpack.c.h.b16 %v714
        %v760 = vunpack.c.l.b16 %v715
        %v761 = vunpack.c.h.b16 %v715
        %v762 = vunpack.c.l.b16 %v716
        %v763 = vunpack.c.h.b16 %v716
        %v764 = vunpack.c.l.b16 %v717
        %v765 = vunpack.c.h.b16 %v717
        %v766 = vpack.c.b16 %v734, %v734
        %v767 = vpack.c.b16 %v735, %v735
        %v768 = vpack.c.b16 %v736, %v736
        %v769 = vpack.c.b16 %v737, %v737
        %v770 = vpack.c.b16 %v738, %v738
        %v771 = vpack.c.b16 %v739, %v739
        %v772 = vpack.c.b16 %v740, %v740
        %v773 = vpack.c.b16 %v741, %v741
        %v774 = vpack.c.b16 %v742, %v742
        %v775 = vpack.c.b16 %v743, %v743
        %v776 = vpack.c.b16 %v744, %v744
        %v777 = vpack.c.b16 %v745, %v745
        %v778 = vpack.c.b16 %v746, %v746
        %v779 = vpack.c.b16 %v747, %v747
        %v780 = vpack.c.b16 %v748, %v748
        %v781 = vpack.c.b16 %v749, %v749
        %v782 = vpack.c.b16 %v750, %v750
        %v783 = vpack.c.b16 %v751, %v751
        %v784 = vpack.c.b16 %v752, %v752
        %v785 = vpack.c.b16 %v753, %v753
        %v786 = vpack.c.b16 %v754, %v754
        %v787 = vpack.c.b16 %v755, %v755
        %v788 = vpack.c.b16 %v756, %v756
        %v789 = vpack.c.b16 %v757, %v757
        %v790 = vpack.c.b16 %v758, %v758
        %v791 = vpack.c.b16 %v759, %v759
        %v792 = vpack.c.b16 %v760, %v760
        %v793 = vpack.c.b16 %v761, %v761
        %v794 = vpack.c.b16 %v762, %v762
        %v795 = vpack.c.b16 %v763, %v763
        %v796 = vpack.c.b16 %v764, %v764
        %v797 = vpack.c.b16 %v765, %v765
        %830 = vst [vmem:[%s164] sm:$0xf] %v766
        %831 = vst [vmem:[%s164 + $0x4] sm:$0xf] %v767
        %832 = vst [vmem:[%s164 + $0x8] sm:$0xf] %v768
        %833 = vst [vmem:[%s164 + $0xc] sm:$0xf] %v769
        %834 = vst [vmem:[%s164 + $0x10] sm:$0xf] %v770
        %835 = vst [vmem:[%s164 + $0x14] sm:$0xf] %v771
        %836 = vst [vmem:[%s164 + $0x18] sm:$0xf] %v772
        %837 = vst [vmem:[%s164 + $0x1c] sm:$0xf] %v773
        %838 = vst [vmem:[%s164 + $0x20] sm:$0xf] %v774
        %839 = vst [vmem:[%s164 + $0x24] sm:$0xf] %v775
        %840 = vst [vmem:[%s164 + $0x28] sm:$0xf] %v776
        %841 = vst [vmem:[%s164 + $0x2c] sm:$0xf] %v777
        %842 = vst [vmem:[%s164 + $0x30] sm:$0xf] %v778
        %843 = vst [vmem:[%s164 + $0x34] sm:$0xf] %v779
        %844 = vst [vmem:[%s164 + $0x38] sm:$0xf] %v780
        %845 = vst [vmem:[%s164 + $0x3c] sm:$0xf] %v781
        %846 = vst [vmem:[%s164 + $0x40] sm:$0xf] %v782
        %847 = vst [vmem:[%s164 + $0x44] sm:$0xf] %v783
        %848 = vst [vmem:[%s164 + $0x48] sm:$0xf] %v784
        %849 = vst [vmem:[%s164 + $0x4c] sm:$0xf] %v785
        %850 = vst [vmem:[%s164 + $0x50] sm:$0xf] %v786
        %851 = vst [vmem:[%s164 + $0x54] sm:$0xf] %v787
        %852 = vst [vmem:[%s164 + $0x58] sm:$0xf] %v788
        %853 = vst [vmem:[%s164 + $0x5c] sm:$0xf] %v789
        %854 = vst [vmem:[%s164 + $0x60] sm:$0xf] %v790
        %855 = vst [vmem:[%s164 + $0x64] sm:$0xf] %v791
        %856 = vst [vmem:[%s164 + $0x68] sm:$0xf] %v792
        %857 = vst [vmem:[%s164 + $0x6c] sm:$0xf] %v793
        %858 = vst [vmem:[%s164 + $0x70] sm:$0xf] %v794
        %859 = vst [vmem:[%s164 + $0x74] sm:$0xf] %v795
        %860 = vst [vmem:[%s164 + $0x78] sm:$0xf] %v796
        %861 = vst [vmem:[%s164 + $0x7c] sm:$0xf] %v797
        %s862 = sand.u32 %s93, 1
        %s863 = scalar_lea.sflag [#allocation3], %s862
        %s864 = sand.u32 %s93, 1
        %s865 = smul.addr %s864, 128
        %s866 = scalar_lea.vmem [#allocation2], %s865
        // Predicated region
        $region33: #{adaptive_fourier_forward.1} parent=31 // pred_check
          %p867 = pneg %p103
        $region34: #{adaptive_fourier_forward.1} parent=31 // pred_check_branch
          %869 = sbr.rel (%p867) target = $region36
        $region35: #{adaptive_fourier_forward.1} parent=31 // pred_region
          %s870 = smul.u32 32, %s17
          %s872 = ssub.s32 2048, 2048
          %873 = vsyncadd %s863, %s872
          %s874 = smul.addr %s870, 64
          %s875 = scalar_lea.hbm %s3, %s874
          %s876 = sshll.u32 %s866, 4
          %s877 = int_to_ptr.vmem [resolvable:$true] %s876
          %882 = dma.vmem_to_hbm [thread:$0]  %s877, 2048, %s875, %s863, 64, 64, 4
        $region36: #{adaptive_fourier_forward.1} parent=31 // pred_fallthru
          _
      $region32: #{adaptive_fourier_forward.1} parent=5 // pred_fallthru
        _
      %p883 = scmp.le.s32.totalorder 2, %s12
      // Predicated region
      $region37: #{adaptive_fourier_forward.1} parent=5 // pred_check
        %p884 = pneg %p883
      $region38: #{adaptive_fourier_forward.1} parent=5 // pred_check_branch
        %886 = sbr.rel (%p884) target = $region40
      $region39: #{adaptive_fourier_forward.1} parent=5 // pred_region
        %s887 = ssub.s32 %s12, 2
        // Predicated region
        $region41: #{adaptive_fourier_forward.1} parent=39 // pred_check
          %p888 = pneg %p109
        $region42: #{adaptive_fourier_forward.1} parent=39 // pred_check_branch
          %890 = sbr.rel (%p888) target = $region44
        $region43: #{adaptive_fourier_forward.1} parent=39 // pred_region
          %s891 = sand.u32 %s94, 1
          %s892 = scalar_lea.sflag [#allocation3], %s891
          %s893 = sand.u32 %s94, 1
          %s894 = smul.addr %s893, 128
          %s895 = scalar_lea.vmem [#allocation2], %s894
          %896 = dma.done %s892, 2048
        $region44: #{adaptive_fourier_forward.1} parent=39 // pred_fallthru
          _
      $region40: #{adaptive_fourier_forward.1} parent=5 // pred_fallthru
        _
    $region6: #{adaptive_fourier_forward.1} parent=1 // loop_footer
      %s16 = sadd.s32 1, %s12
    $region7: #{adaptive_fourier_forward.1} parent=1 // loop_footer_branch
      %11 = sbr.rel target = $region3
    $region8: #{adaptive_fourier_forward.1} parent=1 // loop_exit
      _
    %897 = vsyncpa [#allocation3], 1
    %s898 = scalar_lea.sflag [#allocation3], 1
    %899 = vsyncpa %s898, 1

</llo_original>
